<compile_context>
chip_gen: v7x
topology: tpu7x:2x2x1
jax: 0.10.0
libtpu: 0.0.40
codegen_flags: <defaults>
</compile_context>

<pallas_src>
import numpy as np
import jax
import jax.numpy as jnp
from jax.experimental import pallas as pl
from jax.experimental.pallas import tpu as pltpu

# Model hyper-parameters (the `param` dict of textCNN) -- small synthetic sizes.
PARAM = dict(
    kernel_num=16,
    kernel_size=(3, 4, 5),
    vocab_size=50,
    embed_dim=32,
    dropout=0.5,          # nn.Dropout -> identity at inference time
    class_num=4,
)
BATCH = 2
SEQ_LEN = 16

V_PAD = 128   # vocab rows padded to a full lane tile for the one-hot matmul
C_PAD = 128   # 3*kernel_num = 48 conv channels padded to a full lane tile


def _round_up(x, m):
    return (x + m - 1) // m * m


def _textcnn_kernel(tok_ref, embed_ref, wconv_ref, bconv_ref, mask_ref,
                    wfc_ref, bfc_ref, out_ref):
    """One batch row per grid program; all blocks 8x128-aligned, lane-dense.

    tok_ref   : (S_pad, k_max) int32   column d = token ids shifted by tap d
                                       (-1 past the sequence end -> zero row)
    embed_ref : (V_PAD, E)     bf16    vocab-padded embedding table
    wconv_ref : (k_max*E, C_PAD) bf16  rows [d*E:(d+1)*E] = tap-d weights;
                                       zero cols for taps >= k_i and pad chans
    bconv_ref : (1, C_PAD)     f32
    mask_ref  : (S_pad, C_PAD) f32     1.0 where position < S - k_i + 1
    wfc_ref   : (C_PAD, C)     f32     zero rows for pad channels
    bfc_ref   : (1, C)         f32
    out_ref   : (1, C)         f32     log_softmax row for this batch element
    """
    s_pad, k_max = tok_ref.shape
    v_pad, e_dim = embed_ref.shape

    tok = tok_ref[...]                                            # (S_pad, k_max)
    vocab_iota = jax.lax.broadcasted_iota(jnp.int32, (s_pad, v_pad), 1)
    table = embed_ref[...]                                        # (V_PAD, E) bf16

    # Shifted-accumulate conv: acc = sum_d Embed(ids shifted by d) @ W_d.
    # No rolls / slices / concats of activations -- per tap: one full-block
    # compare (one-hot), one MXU embedding matmul, one MXU conv-tap matmul.
    acc = None
    for d in range(k_max):
        onehot = (tok[:, d:d + 1] == vocab_iota)                  # (S_pad, V_PAD) bool
        onehot = onehot.astype(jnp.float32).astype(table.dtype)   # bf16 one-hot
        emb_d = jnp.dot(onehot, table,
                        preferred_element_type=jnp.float32)       # (S_pad, E) f32
        part = jnp.dot(emb_d.astype(table.dtype),                 # exact bf16 cast
                       wconv_ref[d * e_dim:(d + 1) * e_dim, :],
                       preferred_element_type=jnp.float32)        # (S_pad, C_PAD)
        acc = part if acc is None else acc + part

    # bias + ReLU, zero invalid positions / pad channels, max-over-time.
    acc = jnp.maximum(acc + bconv_ref[...], 0.0) * mask_ref[...]
    feat = jnp.max(acc, axis=0, keepdims=True)                    # (1, C_PAD)

    # dropout is identity at inference time (eval mode).
    logits = jnp.dot(feat, wfc_ref[...],
                     preferred_element_type=jnp.float32) + bfc_ref[...]   # (1, C)

    m = jnp.max(logits, axis=1, keepdims=True)
    z = logits - m
    lse = jnp.log(jnp.sum(jnp.exp(z), axis=1, keepdims=True))
    out_ref[...] = (z - lse).astype(out_ref.dtype)


def _build_mask(s_pad, seq_len, kernel_sizes, kernel_num, c_pad):
    """(s_pad, c_pad) validity mask: 1.0 where position < S - k_i + 1."""
    mask = np.zeros((s_pad, c_pad), np.float32)
    for i, k in enumerate(kernel_sizes):
        mask[:seq_len - k + 1, i * kernel_num:(i + 1) * kernel_num] = 1.0
    return jnp.asarray(mask)


def _build_shifted_tokens(token_ids, s_pad, k_max):
    """(B, S) ids -> (B*s_pad, k_max) int32; column d = ids shifted by d.

    Positions past each sequence's end get the impossible id -1 (so their
    one-hot row -- and hence their embedding -- is exactly zero), and the
    shifts never cross a batch boundary.
    """
    B, S = token_ids.shape
    padded = jnp.full((B, s_pad + k_max), -1, jnp.int32)
    padded = padded.at[:, :S].set(token_ids.astype(jnp.int32))
    taps = jnp.stack([padded[:, d:d + s_pad] for d in range(k_max)], axis=-1)
    return taps.reshape(B * s_pad, k_max)


def textcnn_forward(token_ids, params):
    B, S = token_ids.shape
    ks = PARAM["kernel_size"]
    KN = PARAM["kernel_num"]
    C = PARAM["class_num"]
    k_max = max(ks)
    s_pad = _round_up(S, 8)

    tok_taps = _build_shifted_tokens(token_ids, s_pad, k_max)      # (B*s_pad, k_max)
    mask = _build_mask(s_pad, S, ks, KN, C_PAD)                    # (s_pad, C_PAD)

    v_pad, e_dim = params["embed"].shape
    flops = 2 * B * s_pad * k_max * (v_pad * e_dim + e_dim * C_PAD) + 2 * B * C_PAD * C
    bytes_accessed = int(
        tok_taps.size * 4 + params["embed"].size * 2 + params["conv_w"].size * 2
        + params["conv_b"].size * 4 + mask.size * 4 + params["fc_w"].size * 4
        + params["fc_b"].size * 4 + B * C * 4)

    out = pl.pallas_call(
        _textcnn_kernel,
        out_shape=jax.ShapeDtypeStruct((B, 1, C), jnp.float32),
        grid=(B,),
        in_specs=[
            pl.BlockSpec((s_pad, k_max), lambda b: (b, 0)),          # shifted ids
            pl.BlockSpec((v_pad, e_dim), lambda b: (0, 0)),          # embed table
            pl.BlockSpec((k_max * e_dim, C_PAD), lambda b: (0, 0)),  # conv weight
            pl.BlockSpec((1, C_PAD), lambda b: (0, 0)),              # conv bias
            pl.BlockSpec((s_pad, C_PAD), lambda b: (0, 0)),          # validity mask
            pl.BlockSpec((C_PAD, C), lambda b: (0, 0)),              # fc weight
            pl.BlockSpec((1, C), lambda b: (0, 0)),                  # fc bias
        ],
        out_specs=pl.BlockSpec((None, 1, C), lambda b: (b, 0, 0)),
        compiler_params=pltpu.CompilerParams(
            dimension_semantics=("parallel",),        # batch grid -> both TCs on v7x
            vmem_limit_bytes=32 * 1024 * 1024),
        cost_estimate=pl.CostEstimate(flops=flops,
                                      transcendentals=B * (C + 1),
                                      bytes_accessed=bytes_accessed),
    )(tok_taps, params["embed"], params["conv_w"], params["conv_b"], mask,
      params["fc_w"], params["fc_b"])
    return out.reshape(B, C)


def init_params(key):
    """Deterministic synthetic parameters mirroring textCNN.__init__ shapes."""
    KN = PARAM["kernel_num"]; E = PARAM["embed_dim"]; V = PARAM["vocab_size"]
    C = PARAM["class_num"]; ks = PARAM["kernel_size"]; k_max = max(ks)
    keys = jax.random.split(key, 12)

    # nn.Embedding(vocab, embed_dim, padding_idx=1); bf16 for the MXU, vocab
    # padded to V_PAD rows (pad rows zero).
    embed = jax.random.normal(keys[0], (V, E), jnp.float32).astype(jnp.bfloat16)
    embed = embed.at[1].set(0.0)
    params = {"embed_f32": embed.astype(jnp.float32)}      # exact copy for the reference
    params["embed"] = jnp.zeros((V_PAD, E), jnp.bfloat16).at[:V].set(embed)

    # Combined zero-padded conv weight (k_max*E, C_PAD) and bias (1, C_PAD).
    wconv = jnp.zeros((k_max * E, C_PAD), jnp.float32)
    bconv = jnp.zeros((1, C_PAD), jnp.float32)
    for i, k in enumerate(ks):
        n = k * E * KN                                 # init_weight(): N(0, sqrt(2/n))
        w_oihw = (jax.random.normal(keys[1 + 2 * i], (KN, 1, k, E), jnp.float32)
                  * jnp.sqrt(2.0 / n)).astype(jnp.bfloat16)
        params[f"conv{i}_w_oihw"] = w_oihw.astype(jnp.float32)   # torch layout, for ref
        w_keo = jnp.transpose(w_oihw.astype(jnp.float32)[:, 0, :, :], (1, 2, 0))  # (k,E,KN)
        wconv = wconv.at[:k * E, i * KN:(i + 1) * KN].set(w_keo.reshape(k * E, KN))
        b = jax.random.normal(keys[2 + 2 * i], (1, KN), jnp.float32) * 0.1
        params[f"conv{i}_b"] = b
        bconv = bconv.at[:, i * KN:(i + 1) * KN].set(b)
    params["conv_w"] = wconv.astype(jnp.bfloat16)              # (k_max*E, C_PAD) bf16
    params["conv_b"] = bconv                                   # (1, C_PAD) f32

    # fc1: Linear(3*KN, C); rows past 3*KN zero-padded to C_PAD.
    fc_w_torch = jax.random.normal(keys[8], (C, 3 * KN), jnp.float32) * 0.01
    params["fc_w_ref"] = fc_w_torch.T                          # (3*KN, C) for reference
    params["fc_w"] = jnp.zeros((C_PAD, C), jnp.float32).at[:3 * KN].set(fc_w_torch.T)
    params["fc_b"] = jax.random.normal(keys[9], (1, C), jnp.float32) * 0.1
    return params


def reference_forward(token_ids, params):
    """Pure-JAX reference reproducing the PyTorch forward exactly (NCHW conv)."""
    emb = params["embed_f32"][token_ids]         # (B, S, E)
    x = emb[:, None, :, :]                       # unsqueeze(1) -> NCHW (B,1,S,E)
    feats = []
    for i in range(len(PARAM["kernel_size"])):
        w = params[f"conv{i}_w_oihw"]            # (KN, 1, k, E)
        bias = params[f"conv{i}_b"][0]
        y = jax.lax.conv_general_dilated(
            x, w, window_strides=(1, 1), padding="VALID",
            dimension_numbers=("NCHW", "OIHW", "NCHW"))
        y = y + bias[None, :, None, None]
        y = jnp.squeeze(y, axis=3)               # (B, KN, L)
        y = jnp.maximum(y, 0.0)                  # relu
        feats.append(jnp.max(y, axis=2))         # max_pool1d over the full length
    feat = jnp.concatenate(feats, axis=1)        # (B, 3*KN); dropout = identity (eval)
    logits = feat @ params["fc_w_ref"] + params["fc_b"][0]
    return jax.nn.log_softmax(logits, axis=1)


if __name__ == "__main__":
    key = jax.random.PRNGKey(0)
    pkey, xkey = jax.random.split(key)
    params = init_params(pkey)
    token_ids = jax.random.randint(xkey, (BATCH, SEQ_LEN), 0,
                                   PARAM["vocab_size"], dtype=jnp.int32)

    out = textcnn_forward(token_ids, params)
    out = jax.block_until_ready(out)

    ref = reference_forward(token_ids, params)
    assert out.shape == (BATCH, PARAM["class_num"]), out.shape
    assert jnp.allclose(out, ref, atol=1e-3, rtol=1e-3), (out, ref)
    print("KERNEL_OK")
</pallas_src>

<mosaic_0001>
module attributes {stable_mosaic.version = 11 : i64} {
  func.func @_textcnn_kernel(%arg0: i32, %arg1: memref<16x5xi32, #tpu.memory_space<vmem>>, %arg2: memref<128x32xbf16, #tpu.memory_space<vmem>>, %arg3: memref<160x128xbf16, #tpu.memory_space<vmem>>, %arg4: memref<1x128xf32, #tpu.memory_space<vmem>>, %arg5: memref<16x128xf32, #tpu.memory_space<vmem>>, %arg6: memref<128x4xf32, #tpu.memory_space<vmem>>, %arg7: memref<1x4xf32, #tpu.memory_space<vmem>>, %arg8: memref<1x1x4xf32, #tpu.memory_space<vmem>>) attributes {dimension_semantics = [#tpu.dimension_semantics<parallel>], iteration_bounds = array<i64: 2>, scalar_prefetch = 0 : i64, scratch_operands = 0 : i64, tpu.core_type = #tpu.core_type<tc>, window_params = [{transform_indices = @transform_0, window_bounds = array<i64: 16, 5>}, {pipeline_mode = #tpu.pipeline_mode<synchronous>, transform_indices = @transform_1, window_bounds = array<i64: 128, 32>}, {pipeline_mode = #tpu.pipeline_mode<synchronous>, transform_indices = @transform_2, window_bounds = array<i64: 160, 128>}, {pipeline_mode = #tpu.pipeline_mode<synchronous>, transform_indices = @transform_3, window_bounds = array<i64: 1, 128>}, {pipeline_mode = #tpu.pipeline_mode<synchronous>, transform_indices = @transform_4, window_bounds = array<i64: 16, 128>}, {pipeline_mode = #tpu.pipeline_mode<synchronous>, transform_indices = @transform_5, window_bounds = array<i64: 128, 4>}, {pipeline_mode = #tpu.pipeline_mode<synchronous>, transform_indices = @transform_6, window_bounds = array<i64: 1, 4>}, {transform_indices = @transform_7, window_bounds = array<i64: 1, 1, 4>}]} {
    %c0 = arith.constant 0 : index
    %c0_0 = arith.constant 0 : index
    %0 = vector.load %arg1[%c0, %c0_0] : memref<16x5xi32, #tpu.memory_space<vmem>>, vector<16x5xi32>
    %1 = tpu.iota {dimensions = array<i32: 1>} : vector<16x128xi32>
    %c0_1 = arith.constant 0 : index
    %c0_2 = arith.constant 0 : index
    %2 = vector.load %arg2[%c0_1, %c0_2] : memref<128x32xbf16, #tpu.memory_space<vmem>>, vector<128x32xbf16>
    %3 = vector.extract_strided_slice %0 {offsets = [0, 0], sizes = [16, 1], strides = [1, 1]} : vector<16x5xi32> to vector<16x1xi32>
    %4 = vector.broadcast %3 : vector<16x1xi32> to vector<16x128xi32>
    %5 = arith.cmpi eq, %4, %1 : vector<16x128xi32>
    %6 = arith.extui %5 : vector<16x128xi1> to vector<16x128xi32>
    %7 = arith.sitofp %6 : vector<16x128xi32> to vector<16x128xf32>
    %8 = arith.truncf %7 : vector<16x128xf32> to vector<16x128xbf16>
    %cst = arith.constant dense<0.000000e+00> : vector<16x32xf32>
    %9 = tpu.matmul %8, %2, %cst {dimension_numbers = #tpu.dot_dimension_numbers<[1], [0], [0], [1], [0, 0, 1, 1], [], []>} : vector<16x128xbf16>, vector<128x32xbf16>, vector<16x32xf32> -> vector<16x32xf32>
    %10 = arith.truncf %9 : vector<16x32xf32> to vector<16x32xbf16>
    %c0_3 = arith.constant 0 : index
    %c0_4 = arith.constant 0 : index
    %11 = vector.load %arg3[%c0_3, %c0_4] : memref<160x128xbf16, #tpu.memory_space<vmem>>, vector<32x128xbf16>
    %cst_5 = arith.constant dense<0.000000e+00> : vector<16x128xf32>
    %12 = tpu.matmul %10, %11, %cst_5 {dimension_numbers = #tpu.dot_dimension_numbers<[1], [0], [0], [1], [0, 0, 1, 1], [], []>} : vector<16x32xbf16>, vector<32x128xbf16>, vector<16x128xf32> -> vector<16x128xf32>
    %13 = vector.extract_strided_slice %0 {offsets = [0, 1], sizes = [16, 1], strides = [1, 1]} : vector<16x5xi32> to vector<16x1xi32>
    %14 = vector.broadcast %13 : vector<16x1xi32> to vector<16x128xi32>
    %15 = arith.cmpi eq, %14, %1 : vector<16x128xi32>
    %16 = arith.extui %15 : vector<16x128xi1> to vector<16x128xi32>
    %17 = arith.sitofp %16 : vector<16x128xi32> to vector<16x128xf32>
    %18 = arith.truncf %17 : vector<16x128xf32> to vector<16x128xbf16>
    %cst_6 = arith.constant dense<0.000000e+00> : vector<16x32xf32>
    %19 = tpu.matmul %18, %2, %cst_6 {dimension_numbers = #tpu.dot_dimension_numbers<[1], [0], [0], [1], [0, 0, 1, 1], [], []>} : vector<16x128xbf16>, vector<128x32xbf16>, vector<16x32xf32> -> vector<16x32xf32>
    %20 = arith.truncf %19 : vector<16x32xf32> to vector<16x32xbf16>
    %c32 = arith.constant 32 : index
    %c0_7 = arith.constant 0 : index
    %21 = vector.load %arg3[%c32, %c0_7] : memref<160x128xbf16, #tpu.memory_space<vmem>>, vector<32x128xbf16>
    %cst_8 = arith.constant dense<0.000000e+00> : vector<16x128xf32>
    %22 = tpu.matmul %20, %21, %cst_8 {dimension_numbers = #tpu.dot_dimension_numbers<[1], [0], [0], [1], [0, 0, 1, 1], [], []>} : vector<16x32xbf16>, vector<32x128xbf16>, vector<16x128xf32> -> vector<16x128xf32>
    %23 = arith.addf %12, %22 : vector<16x128xf32>
    %24 = vector.extract_strided_slice %0 {offsets = [0, 2], sizes = [16, 1], strides = [1, 1]} : vector<16x5xi32> to vector<16x1xi32>
    %25 = vector.broadcast %24 : vector<16x1xi32> to vector<16x128xi32>
    %26 = arith.cmpi eq, %25, %1 : vector<16x128xi32>
    %27 = arith.extui %26 : vector<16x128xi1> to vector<16x128xi32>
    %28 = arith.sitofp %27 : vector<16x128xi32> to vector<16x128xf32>
    %29 = arith.truncf %28 : vector<16x128xf32> to vector<16x128xbf16>
    %cst_9 = arith.constant dense<0.000000e+00> : vector<16x32xf32>
    %30 = tpu.matmul %29, %2, %cst_9 {dimension_numbers = #tpu.dot_dimension_numbers<[1], [0], [0], [1], [0, 0, 1, 1], [], []>} : vector<16x128xbf16>, vector<128x32xbf16>, vector<16x32xf32> -> vector<16x32xf32>
    %31 = arith.truncf %30 : vector<16x32xf32> to vector<16x32xbf16>
    %c64 = arith.constant 64 : index
    %c0_10 = arith.constant 0 : index
    %32 = vector.load %arg3[%c64, %c0_10] : memref<160x128xbf16, #tpu.memory_space<vmem>>, vector<32x128xbf16>
    %cst_11 = arith.constant dense<0.000000e+00> : vector<16x128xf32>
    %33 = tpu.matmul %31, %32, %cst_11 {dimension_numbers = #tpu.dot_dimension_numbers<[1], [0], [0], [1], [0, 0, 1, 1], [], []>} : vector<16x32xbf16>, vector<32x128xbf16>, vector<16x128xf32> -> vector<16x128xf32>
    %34 = arith.addf %23, %33 : vector<16x128xf32>
    %35 = vector.extract_strided_slice %0 {offsets = [0, 3], sizes = [16, 1], strides = [1, 1]} : vector<16x5xi32> to vector<16x1xi32>
    %36 = vector.broadcast %35 : vector<16x1xi32> to vector<16x128xi32>
    %37 = arith.cmpi eq, %36, %1 : vector<16x128xi32>
    %38 = arith.extui %37 : vector<16x128xi1> to vector<16x128xi32>
    %39 = arith.sitofp %38 : vector<16x128xi32> to vector<16x128xf32>
    %40 = arith.truncf %39 : vector<16x128xf32> to vector<16x128xbf16>
    %cst_12 = arith.constant dense<0.000000e+00> : vector<16x32xf32>
    %41 = tpu.matmul %40, %2, %cst_12 {dimension_numbers = #tpu.dot_dimension_numbers<[1], [0], [0], [1], [0, 0, 1, 1], [], []>} : vector<16x128xbf16>, vector<128x32xbf16>, vector<16x32xf32> -> vector<16x32xf32>
    %42 = arith.truncf %41 : vector<16x32xf32> to vector<16x32xbf16>
    %c96 = arith.constant 96 : index
    %c0_13 = arith.constant 0 : index
    %43 = vector.load %arg3[%c96, %c0_13] : memref<160x128xbf16, #tpu.memory_space<vmem>>, vector<32x128xbf16>
    %cst_14 = arith.constant dense<0.000000e+00> : vector<16x128xf32>
    %44 = tpu.matmul %42, %43, %cst_14 {dimension_numbers = #tpu.dot_dimension_numbers<[1], [0], [0], [1], [0, 0, 1, 1], [], []>} : vector<16x32xbf16>, vector<32x128xbf16>, vector<16x128xf32> -> vector<16x128xf32>
    %45 = arith.addf %34, %44 : vector<16x128xf32>
    %46 = vector.extract_strided_slice %0 {offsets = [0, 4], sizes = [16, 1], strides = [1, 1]} : vector<16x5xi32> to vector<16x1xi32>
    %47 = vector.broadcast %46 : vector<16x1xi32> to vector<16x128xi32>
    %48 = arith.cmpi eq, %47, %1 : vector<16x128xi32>
    %49 = arith.extui %48 : vector<16x128xi1> to vector<16x128xi32>
    %50 = arith.sitofp %49 : vector<16x128xi32> to vector<16x128xf32>
    %51 = arith.truncf %50 : vector<16x128xf32> to vector<16x128xbf16>
    %cst_15 = arith.constant dense<0.000000e+00> : vector<16x32xf32>
    %52 = tpu.matmul %51, %2, %cst_15 {dimension_numbers = #tpu.dot_dimension_numbers<[1], [0], [0], [1], [0, 0, 1, 1], [], []>} : vector<16x128xbf16>, vector<128x32xbf16>, vector<16x32xf32> -> vector<16x32xf32>
    %53 = arith.truncf %52 : vector<16x32xf32> to vector<16x32xbf16>
    %c128 = arith.constant 128 : index
    %c0_16 = arith.constant 0 : index
    %54 = vector.load %arg3[%c128, %c0_16] : memref<160x128xbf16, #tpu.memory_space<vmem>>, vector<32x128xbf16>
    %cst_17 = arith.constant dense<0.000000e+00> : vector<16x128xf32>
    %55 = tpu.matmul %53, %54, %cst_17 {dimension_numbers = #tpu.dot_dimension_numbers<[1], [0], [0], [1], [0, 0, 1, 1], [], []>} : vector<16x32xbf16>, vector<32x128xbf16>, vector<16x128xf32> -> vector<16x128xf32>
    %56 = arith.addf %45, %55 : vector<16x128xf32>
    %c0_18 = arith.constant 0 : index
    %c0_19 = arith.constant 0 : index
    %57 = vector.load %arg4[%c0_18, %c0_19] : memref<1x128xf32, #tpu.memory_space<vmem>>, vector<1x128xf32>
    %58 = vector.broadcast %57 : vector<1x128xf32> to vector<16x128xf32>
    %59 = arith.addf %56, %58 : vector<16x128xf32>
    %cst_20 = arith.constant 0.000000e+00 : f32
    %60 = vector.broadcast %cst_20 : f32 to vector<16x128xf32>
    %61 = arith.maximumf %59, %60 : vector<16x128xf32>
    %c0_21 = arith.constant 0 : index
    %c0_22 = arith.constant 0 : index
    %62 = vector.load %arg5[%c0_21, %c0_22] : memref<16x128xf32, #tpu.memory_space<vmem>>, vector<16x128xf32>
    %63 = arith.mulf %61, %62 : vector<16x128xf32>
    %cst_23 = arith.constant dense<0xFF800000> : vector<128xf32>
    %64 = vector.multi_reduction <maximumf>, %63, %cst_23 [0] : vector<16x128xf32> to vector<128xf32>
    %65 = vector.shape_cast %64 : vector<128xf32> to vector<1x128xf32>
    %c0_24 = arith.constant 0 : index
    %c0_25 = arith.constant 0 : index
    %66 = vector.load %arg6[%c0_24, %c0_25] : memref<128x4xf32, #tpu.memory_space<vmem>>, vector<128x4xf32>
    %cst_26 = arith.constant dense<0.000000e+00> : vector<1x4xf32>
    %67 = tpu.matmul %65, %66, %cst_26 {dimension_numbers = #tpu.dot_dimension_numbers<[1], [0], [0], [1], [0, 0, 1, 1], [], []>} : vector<1x128xf32>, vector<128x4xf32>, vector<1x4xf32> -> vector<1x4xf32>
    %c0_27 = arith.constant 0 : index
    %c0_28 = arith.constant 0 : index
    %68 = vector.load %arg7[%c0_27, %c0_28] : memref<1x4xf32, #tpu.memory_space<vmem>>, vector<1x4xf32>
    %69 = arith.addf %67, %68 : vector<1x4xf32>
    %cst_29 = arith.constant dense<0xFF800000> : vector<1xf32>
    %70 = vector.multi_reduction <maximumf>, %69, %cst_29 [1] : vector<1x4xf32> to vector<1xf32>
    %71 = vector.shape_cast %70 : vector<1xf32> to vector<1x1xf32>
    %72 = vector.broadcast %71 : vector<1x1xf32> to vector<1x4xf32>
    %73 = arith.subf %69, %72 : vector<1x4xf32>
    %74 = math.exp %73 : vector<1x4xf32>
    %cst_30 = arith.constant dense<0.000000e+00> : vector<1xf32>
    %75 = vector.multi_reduction <add>, %74, %cst_30 [1] : vector<1x4xf32> to vector<1xf32>
    %76 = vector.shape_cast %75 : vector<1xf32> to vector<1x1xf32>
    %77 = math.log %76 : vector<1x1xf32>
    %78 = vector.broadcast %77 : vector<1x1xf32> to vector<1x4xf32>
    %79 = arith.subf %73, %78 : vector<1x4xf32>
    %c0_31 = arith.constant 0 : index
    %c0_32 = arith.constant 0 : index
    %c0_33 = arith.constant 0 : index
    %80 = vector.load %arg8[%c0_31, %c0_32, %c0_33] : memref<1x1x4xf32, #tpu.memory_space<vmem>>, vector<1x1x4xf32>
    %81 = vector.shape_cast %80 : vector<1x1x4xf32> to vector<1x4xf32>
    %82 = vector.shape_cast %79 : vector<1x4xf32> to vector<1x1x4xf32>
    tpu.vector_store %arg8[%c0_31, %c0_32, %c0_33], %82 {strides = array<i32>} : memref<1x1x4xf32, #tpu.memory_space<vmem>>, vector<1x1x4xf32>,
    return
  }
  func.func @transform_0(%arg0: i32) -> (i32, i32) {
    %c0_i32 = arith.constant 0 : i32
    %c0_i32_0 = arith.constant 0 : i32
    return %arg0, %c0_i32 : i32, i32
  }
  func.func @transform_1(%arg0: i32) -> (i32, i32) {
    %c0_i32 = arith.constant 0 : i32
    %c0_i32_0 = arith.constant 0 : i32
    %c0_i32_1 = arith.constant 0 : i32
    return %c0_i32, %c0_i32_0 : i32, i32
  }
  func.func @transform_2(%arg0: i32) -> (i32, i32) {
    %c0_i32 = arith.constant 0 : i32
    %c0_i32_0 = arith.constant 0 : i32
    %c0_i32_1 = arith.constant 0 : i32
    return %c0_i32, %c0_i32_0 : i32, i32
  }
  func.func @transform_3(%arg0: i32) -> (i32, i32) {
    %c0_i32 = arith.constant 0 : i32
    %c0_i32_0 = arith.constant 0 : i32
    %c0_i32_1 = arith.constant 0 : i32
    return %c0_i32, %c0_i32_0 : i32, i32
  }
  func.func @transform_4(%arg0: i32) -> (i32, i32) {
    %c0_i32 = arith.constant 0 : i32
    %c0_i32_0 = arith.constant 0 : i32
    %c0_i32_1 = arith.constant 0 : i32
    return %c0_i32, %c0_i32_0 : i32, i32
  }
  func.func @transform_5(%arg0: i32) -> (i32, i32) {
    %c0_i32 = arith.constant 0 : i32
    %c0_i32_0 = arith.constant 0 : i32
    %c0_i32_1 = arith.constant 0 : i32
    return %c0_i32, %c0_i32_0 : i32, i32
  }
  func.func @transform_6(%arg0: i32) -> (i32, i32) {
    %c0_i32 = arith.constant 0 : i32
    %c0_i32_0 = arith.constant 0 : i32
    %c0_i32_1 = arith.constant 0 : i32
    return %c0_i32, %c0_i32_0 : i32, i32
  }
  func.func @transform_7(%arg0: i32) -> (i32, i32, i32) {
    %c0_i32 = arith.constant 0 : i32
    %c0_i32_0 = arith.constant 0 : i32
    %c0_i32_1 = arith.constant 0 : i32
    return %arg0, %c0_i32, %c0_i32_0 : i32, i32, i32
  }
}

</mosaic_0001>

<llo_original>
// kernel: tpu_custom_call.1
$region0: #{tpu_custom_call.1}
  #allocation0 [shape = 'u32[]', space=smem, size = 0x4, offset = 0x4, fixed_abs, tag = 'smem constant byte address 0x4 - core index']
  #allocation1 [shape = 'u32[144,128]{1,0:T(1,128)}', space=vmem, size = 0x12000, scoped, tag = 'internal scratch']
  %s0 = inlined_call_operand.vmem [shape: s32[32,5], index: 0, kind: input, shape index: {}]
  %s1 = inlined_call_operand.vmem [shape: bf16[128,32], index: 1, kind: input, shape index: {}]
  %s2 = inlined_call_operand.vmem [shape: bf16[160,128], index: 2, kind: input, shape index: {}]
  %s3 = inlined_call_operand.vmem [shape: f32[1,128], index: 3, kind: input, shape index: {}]
  %s4 = inlined_call_operand.vmem [shape: f32[16,128], index: 4, kind: input, shape index: {}]
  %s5 = inlined_call_operand.vmem [shape: f32[128,4], index: 5, kind: input, shape index: {}]
  %s6 = inlined_call_operand.vmem [shape: f32[1,4], index: 6, kind: input, shape index: {}]
  %s7 = inlined_call_operand.hbm [shape: f32[2,1,4], index: 7, kind: output, shape index: {}]
  %s8 = sld [smem:[#allocation0]]
  $region61: #{tpu_custom_call.1} parent=0
    _
  %s10 = ssub.s32 1, %s8
  %s11 = scalar_select 0, %s10, %s8
  $region1: #{tpu_custom_call.1} parent=0
    #allocation2 [shape = 'u8[1024]{0}', space=vmem, size = 0x400, scoped, tag = 'output window, operand 0']
    #allocation3 [shape = 's32[2]{0}', space=sflag, size = 0x8, scoped, tag = 'scoped memory for tpu_custom_call.1']
    %12 = vsyncpa [#allocation3], 0
    %s13 = scalar_lea.sflag [#allocation3], 1
    %14 = vsyncpa %s13, 0
    loop: start=0, step=1, limit=4
    $region2: #{tpu_custom_call.1} parent=1 // loop_pre_header
      _
    $region3: #{tpu_custom_call.1} parent=1 // loop_header
      %s16 = sphi 0, %s20
      %p17 = scmp.ge.s32.totalorder %s16, 4
      %s26 = sphi 0, %s28
      %s29 = sphi 0, %s26
      %s30 = sphi 0, %s29
      %s46 = sphi 0, %s30
      %s50 = sphi 0, %s50
      %s52 = sphi 0, %s50
      %s53 = sphi 0, %s52
      %s67 = sphi 0, %s53
      %s71 = sphi 0, %s71
      %s73 = sphi 0, %s71
      %s74 = sphi 0, %s73
      %s88 = sphi 0, %s74
      %s92 = sphi 0, %s92
      %s94 = sphi 0, %s92
      %s95 = sphi 0, %s94
      %s109 = sphi 0, %s95
      %s113 = sphi 0, %s113
      %s115 = sphi 0, %s113
      %s116 = sphi 0, %s115
      %s130 = sphi 0, %s116
      %s134 = sphi 0, %s134
      %s136 = sphi 0, %s134
      %s137 = sphi 0, %s136
      %s151 = sphi 0, %s137
      %s155 = sphi 0, %s155
      %s157 = sphi 0, %s155
      %s158 = sphi 0, %s157
      %s172 = sphi 0, %s158
      %s178 = sphi 0, %s180
      %s181 = sphi 0, %s178
      %s182 = sphi 0, %s181
      %s198 = sphi 0, %s182
    $region4: #{tpu_custom_call.1} parent=1 // loop_header_branch
      %19 = sbr.rel (%p17) target = $region8
    $region5: #{tpu_custom_call.1} parent=1 // loop_body
      %s21 = ssub.s32 %s16, 1
      %s22 = ssub.s32 %s16, 2
      %s23 = sadd.s32 %s16, 1
      %s24 = ssub.s32 %s16, %s23
      %p25 = scmp.eq.s32.totalorder %s24, 0
      %s27 = sadd.s32 %s26, 1
      %s28 = scalar_select %p25, %s26, %s27
      %p31 = pneg %p25
      %p32 = scmp.eq.s32.totalorder %s16, 1
      %p33 = por %p31, %p32
      %p34 = scmp.ne.s32.totalorder %s26, %s29
      %p35 = scmp.eq.s32.totalorder %s16, 0
      %p36 = por %p34, %p35
      %p37 = scmp.ne.s32.totalorder %s26, %s29
      %p38 = scmp.eq.s32.totalorder %s21, 1
      %p39 = por %p37, %p38
      %p40 = scmp.ne.s32.totalorder %s29, %s30
      %p41 = scmp.eq.s32.totalorder %s21, 0
      %p42 = por %p40, %p41
      %p43 = scmp.ne.s32.totalorder %s29, %s30
      %p44 = scmp.eq.s32.totalorder %s22, 1
      %p45 = por %p43, %p44
      %p47 = scmp.ne.s32.totalorder %s30, %s46
      %p48 = scmp.eq.s32.totalorder %s22, 0
      %p49 = por %p47, %p48
      %s51 = sadd.s32 %s50, 1
      %p54 = scmp.eq.s32.totalorder %s16, 1
      %p55 = scmp.ne.s32.totalorder %s50, %s52
      %p56 = scmp.eq.s32.totalorder %s16, 0
      %p57 = por %p55, %p56
      %p58 = scmp.ne.s32.totalorder %s50, %s52
      %p59 = scmp.eq.s32.totalorder %s21, 1
      %p60 = por %p58, %p59
      %p61 = scmp.ne.s32.totalorder %s52, %s53
      %p62 = scmp.eq.s32.totalorder %s21, 0
      %p63 = por %p61, %p62
      %p64 = scmp.ne.s32.totalorder %s52, %s53
      %p65 = scmp.eq.s32.totalorder %s22, 1
      %p66 = por %p64, %p65
      %p68 = scmp.ne.s32.totalorder %s53, %s67
      %p69 = scmp.eq.s32.totalorder %s22, 0
      %p70 = por %p68, %p69
      %s72 = sadd.s32 %s71, 1
      %p75 = scmp.eq.s32.totalorder %s16, 1
      %p76 = scmp.ne.s32.totalorder %s71, %s73
      %p77 = scmp.eq.s32.totalorder %s16, 0
      %p78 = por %p76, %p77
      %p79 = scmp.ne.s32.totalorder %s71, %s73
      %p80 = scmp.eq.s32.totalorder %s21, 1
      %p81 = por %p79, %p80
      %p82 = scmp.ne.s32.totalorder %s73, %s74
      %p83 = scmp.eq.s32.totalorder %s21, 0
      %p84 = por %p82, %p83
      %p85 = scmp.ne.s32.totalorder %s73, %s74
      %p86 = scmp.eq.s32.totalorder %s22, 1
      %p87 = por %p85, %p86
      %p89 = scmp.ne.s32.totalorder %s74, %s88
      %p90 = scmp.eq.s32.totalorder %s22, 0
      %p91 = por %p89, %p90
      %s93 = sadd.s32 %s92, 1
      %p96 = scmp.eq.s32.totalorder %s16, 1
      %p97 = scmp.ne.s32.totalorder %s92, %s94
      %p98 = scmp.eq.s32.totalorder %s16, 0
      %p99 = por %p97, %p98
      %p100 = scmp.ne.s32.totalorder %s92, %s94
      %p101 = scmp.eq.s32.totalorder %s21, 1
      %p102 = por %p100, %p101
      %p103 = scmp.ne.s32.totalorder %s94, %s95
      %p104 = scmp.eq.s32.totalorder %s21, 0
      %p105 = por %p103, %p104
      %p106 = scmp.ne.s32.totalorder %s94, %s95
      %p107 = scmp.eq.s32.totalorder %s22, 1
      %p108 = por %p106, %p107
      %p110 = scmp.ne.s32.totalorder %s95, %s109
      %p111 = scmp.eq.s32.totalorder %s22, 0
      %p112 = por %p110, %p111
      %s114 = sadd.s32 %s113, 1
      %p117 = scmp.eq.s32.totalorder %s16, 1
      %p118 = scmp.ne.s32.totalorder %s113, %s115
      %p119 = scmp.eq.s32.totalorder %s16, 0
      %p120 = por %p118, %p119
      %p121 = scmp.ne.s32.totalorder %s113, %s115
      %p122 = scmp.eq.s32.totalorder %s21, 1
      %p123 = por %p121, %p122
      %p124 = scmp.ne.s32.totalorder %s115, %s116
      %p125 = scmp.eq.s32.totalorder %s21, 0
      %p126 = por %p124, %p125
      %p127 = scmp.ne.s32.totalorder %s115, %s116
      %p128 = scmp.eq.s32.totalorder %s22, 1
      %p129 = por %p127, %p128
      %p131 = scmp.ne.s32.totalorder %s116, %s130
      %p132 = scmp.eq.s32.totalorder %s22, 0
      %p133 = por %p131, %p132
      %s135 = sadd.s32 %s134, 1
      %p138 = scmp.eq.s32.totalorder %s16, 1
      %p139 = scmp.ne.s32.totalorder %s134, %s136
      %p140 = scmp.eq.s32.totalorder %s16, 0
      %p141 = por %p139, %p140
      %p142 = scmp.ne.s32.totalorder %s134, %s136
      %p143 = scmp.eq.s32.totalorder %s21, 1
      %p144 = por %p142, %p143
      %p145 = scmp.ne.s32.totalorder %s136, %s137
      %p146 = scmp.eq.s32.totalorder %s21, 0
      %p147 = por %p145, %p146
      %p148 = scmp.ne.s32.totalorder %s136, %s137
      %p149 = scmp.eq.s32.totalorder %s22, 1
      %p150 = por %p148, %p149
      %p152 = scmp.ne.s32.totalorder %s137, %s151
      %p153 = scmp.eq.s32.totalorder %s22, 0
      %p154 = por %p152, %p153
      %s156 = sadd.s32 %s155, 1
      %p159 = scmp.eq.s32.totalorder %s16, 1
      %p160 = scmp.ne.s32.totalorder %s155, %s157
      %p161 = scmp.eq.s32.totalorder %s16, 0
      %p162 = por %p160, %p161
      %p163 = scmp.ne.s32.totalorder %s155, %s157
      %p164 = scmp.eq.s32.totalorder %s21, 1
      %p165 = por %p163, %p164
      %p166 = scmp.ne.s32.totalorder %s157, %s158
      %p167 = scmp.eq.s32.totalorder %s21, 0
      %p168 = por %p166, %p167
      %p169 = scmp.ne.s32.totalorder %s157, %s158
      %p170 = scmp.eq.s32.totalorder %s22, 1
      %p171 = por %p169, %p170
      %p173 = scmp.ne.s32.totalorder %s158, %s172
      %p174 = scmp.eq.s32.totalorder %s22, 0
      %p175 = por %p173, %p174
      %s176 = ssub.s32 %s16, %s23
      %p177 = scmp.eq.s32.totalorder %s176, 0
      %s179 = sadd.s32 %s178, 1
      %s180 = scalar_select %p177, %s178, %s179
      %p183 = pneg %p177
      %p184 = scmp.eq.s32.totalorder %s16, 1
      %p185 = por %p183, %p184
      %p186 = scmp.ne.s32.totalorder %s178, %s181
      %p187 = scmp.eq.s32.totalorder %s16, 0
      %p188 = por %p186, %p187
      %p189 = scmp.ne.s32.totalorder %s178, %s181
      %p190 = scmp.eq.s32.totalorder %s21, 1
      %p191 = por %p189, %p190
      %p192 = scmp.ne.s32.totalorder %s181, %s182
      %p193 = scmp.eq.s32.totalorder %s21, 0
      %p194 = por %p192, %p193
      %p195 = scmp.ne.s32.totalorder %s181, %s182
      %p196 = scmp.eq.s32.totalorder %s22, 1
      %p197 = por %p195, %p196
      %p199 = scmp.ne.s32.totalorder %s182, %s198
      %p200 = scmp.eq.s32.totalorder %s22, 0
      %p201 = por %p199, %p200
      %p202 = scmp.le.s32.totalorder 1, %s16
      %p203 = scmp.lt.s32.totalorder %s16, 3
      %p204 = pnand %p202, %p203
      %p205 = pneg %p204
      // Predicated region
      $region9: #{tpu_custom_call.1} parent=5 // pred_check
        _
      $region10: #{tpu_custom_call.1} parent=5 // pred_check_branch
        %207 = sbr.rel (%p204) target = $region12
      $region11: #{tpu_custom_call.1} parent=5 // pred_region
        %s208 = ssub.s32 %s16, 1
        // Predicated region
        $region13: #{tpu_custom_call.1} parent=11 // pred_check
          %p209 = pneg %p63
        $region14: #{tpu_custom_call.1} parent=11 // pred_check_branch
          %211 = sbr.rel (%p209) target = $region16
        $region15: #{tpu_custom_call.1} parent=11 // pred_region
          _
        $region16: #{tpu_custom_call.1} parent=11 // pred_fallthru
          _
        // Predicated region
        $region17: #{tpu_custom_call.1} parent=11 // pred_check
          %p212 = pneg %p84
        $region18: #{tpu_custom_call.1} parent=11 // pred_check_branch
          %214 = sbr.rel (%p212) target = $region20
        $region19: #{tpu_custom_call.1} parent=11 // pred_region
          _
        $region20: #{tpu_custom_call.1} parent=11 // pred_fallthru
          _
        // Predicated region
        $region21: #{tpu_custom_call.1} parent=11 // pred_check
          %p215 = pneg %p105
        $region22: #{tpu_custom_call.1} parent=11 // pred_check_branch
          %217 = sbr.rel (%p215) target = $region24
        $region23: #{tpu_custom_call.1} parent=11 // pred_region
          _
        $region24: #{tpu_custom_call.1} parent=11 // pred_fallthru
          _
        // Predicated region
        $region25: #{tpu_custom_call.1} parent=11 // pred_check
          %p218 = pneg %p126
        $region26: #{tpu_custom_call.1} parent=11 // pred_check_branch
          %220 = sbr.rel (%p218) target = $region28
        $region27: #{tpu_custom_call.1} parent=11 // pred_region
          _
        $region28: #{tpu_custom_call.1} parent=11 // pred_fallthru
          _
        // Predicated region
        $region29: #{tpu_custom_call.1} parent=11 // pred_check
          %p221 = pneg %p147
        $region30: #{tpu_custom_call.1} parent=11 // pred_check_branch
          %223 = sbr.rel (%p221) target = $region32
        $region31: #{tpu_custom_call.1} parent=11 // pred_region
          _
        $region32: #{tpu_custom_call.1} parent=11 // pred_fallthru
          _
        // Predicated region
        $region33: #{tpu_custom_call.1} parent=11 // pred_check
          %p224 = pneg %p168
        $region34: #{tpu_custom_call.1} parent=11 // pred_check_branch
          %226 = sbr.rel (%p224) target = $region36
        $region35: #{tpu_custom_call.1} parent=11 // pred_region
          _
        $region36: #{tpu_custom_call.1} parent=11 // pred_fallthru
          _
      $region12: #{tpu_custom_call.1} parent=5 // pred_fallthru
        _
      %p227 = scmp.lt.s32.totalorder %s16, 2
      // Predicated region
      $region37: #{tpu_custom_call.1} parent=5 // pred_check
        %p228 = pneg %p227
      $region38: #{tpu_custom_call.1} parent=5 // pred_check_branch
        %230 = sbr.rel (%p228) target = $region40
      $region39: #{tpu_custom_call.1} parent=5 // pred_region
        // Predicated region
        $region41: #{tpu_custom_call.1} parent=39 // pred_check
          %p231 = pneg %p36
        $region42: #{tpu_custom_call.1} parent=39 // pred_check_branch
          %233 = sbr.rel (%p231) target = $region44
        $region43: #{tpu_custom_call.1} parent=39 // pred_region
          %s234 = smul.u32 2, %s16
          %p235 = scmp.lt.s32.totalorder %s234, 3
          %s236 = scalar_select %p235, %s234, 3
          %s237 = smul.addr %s236, 8
          %s238 = scalar_lea.vmem %s0, %s237
          %s239 = smul.u32 2, %s16
        $region44: #{tpu_custom_call.1} parent=39 // pred_fallthru
          _
      $region40: #{tpu_custom_call.1} parent=5 // pred_fallthru
        _
      %p240 = scmp.le.s32.totalorder 1, %s16
      %p241 = scmp.lt.s32.totalorder %s16, 3
      %p242 = pnand %p240, %p241
      %p243 = pneg %p242
      // Predicated region
      $region45: #{tpu_custom_call.1} parent=5 // pred_check
        _
      $region46: #{tpu_custom_call.1} parent=5 // pred_check_branch
        %245 = sbr.rel (%p242) target = $region48
      $region47: #{tpu_custom_call.1} parent=5 // pred_region
        %s246 = ssub.s32 %s16, 1
        %s247 = smul.u32 2, %s21
        %p248 = scmp.lt.s32.totalorder %s247, 3
        %s249 = scalar_select %p248, %s247, 3
        %s250 = smul.addr %s249, 8
        %s251 = scalar_lea.vmem %s0, %s250
        %p252 = pneg %p42
        %p253 = pneg %p39
        %p254 = pneg %p63
        %p255 = pneg %p60
        %p256 = pneg %p84
        %p257 = pneg %p81
        %p258 = pneg %p105
        %p259 = pneg %p102
        %p260 = pneg %p126
        %p261 = pneg %p123
        %p262 = pneg %p147
        %p263 = pneg %p144
        %p264 = pneg %p168
        %p265 = pneg %p165
        %p266 = pneg %p194
        %p267 = pneg %p191
        %s268 = sand.u32 %s181, 1
        %s269 = scalar_lea.sflag [#allocation3], %s268
        %s270 = sand.u32 %s181, 1
        %s271 = scalar_lea.vmem [#allocation2], %s270
        %s272 = smul.u32 2, %s21
        %p273 = scmp.lt.s32.totalorder %s272, 3
        %s274 = scalar_select %p273, %s272, 3
        %s275 = smul.addr %s274, 8
        %s276 = scalar_lea.vmem %s0, %s275
        %s277 = smul.u32 2, %s21
        %v279 = vld [vmem:[%s276] sm:$0xff]
        %v280 = vld [vmem:[%s276 + $0x8] sm:$0xff]
        %v281 = vlaneseq
        %v282 = vand.u32 %v281, 127
        %v283 = vld [vmem:[%s1] sm:$0xf]
        %v284 = vld [vmem:[%s1 + $0x4] sm:$0xf]
        %v285 = vld [vmem:[%s1 + $0x8] sm:$0xf]
        %v286 = vld [vmem:[%s1 + $0xc] sm:$0xf]
        %v287 = vld [vmem:[%s1 + $0x10] sm:$0xf]
        %v288 = vld [vmem:[%s1 + $0x14] sm:$0xf]
        %v289 = vld [vmem:[%s1 + $0x18] sm:$0xf]
        %v290 = vld [vmem:[%s1 + $0x1c] sm:$0xf]
        %v291 = vld [vmem:[%s1 + $0x20] sm:$0xf]
        %v292 = vld [vmem:[%s1 + $0x24] sm:$0xf]
        %v293 = vld [vmem:[%s1 + $0x28] sm:$0xf]
        %v294 = vld [vmem:[%s1 + $0x2c] sm:$0xf]
        %v295 = vld [vmem:[%s1 + $0x30] sm:$0xf]
        %v296 = vld [vmem:[%s1 + $0x34] sm:$0xf]
        %v297 = vld [vmem:[%s1 + $0x38] sm:$0xf]
        %v298 = vld [vmem:[%s1 + $0x3c] sm:$0xf]
        %299 = vset.pattern.permute.xlu0 0
        %300 = vperm.xlu0 %299, %v279
        %v301 = vpop.permute.xlu0 %300
        %302 = vset.pattern.permute.xlu0 0
        %303 = vperm.xlu0 %302, %v280
        %v304 = vpop.permute.xlu0 %303
        %vm305 = vcmp.eq.s32.totalorder %v301, %v282
        %vm306 = vcmp.eq.s32.totalorder %v304, %v282
        %v307 = vsel %vm305, 1, 0
        %v308 = vsel %vm306, 1, 0
        %v309 = vcvt.s32.f32 %v307
        %v310 = vcvt.s32.f32 %v308
        %v311 = vpack.c.bf16 %v310, %v309
        %v328 = vunpack.c.l.b16 %v283
        %v329 = vunpack.c.l.b16 %v284
        %v330 = vunpack.c.l.b16 %v285
        %v331 = vunpack.c.l.b16 %v286
        %v332 = vunpack.c.l.b16 %v287
        %v333 = vunpack.c.l.b16 %v288
        %v334 = vunpack.c.l.b16 %v289
        %v335 = vunpack.c.l.b16 %v290
        %v336 = vunpack.c.l.b16 %v291
        %v337 = vunpack.c.l.b16 %v292
        %v338 = vunpack.c.l.b16 %v293
        %v339 = vunpack.c.l.b16 %v294
        %v340 = vunpack.c.l.b16 %v295
        %v341 = vunpack.c.l.b16 %v296
        %v342 = vunpack.c.l.b16 %v297
        %v343 = vunpack.c.l.b16 %v298
        %v344 = vpack.c.b16 %v329, %v328
        %v345 = vpack.c.b16 %v331, %v330
        %v346 = vpack.c.b16 %v333, %v332
        %v347 = vpack.c.b16 %v335, %v334
        %v348 = vpack.c.b16 %v337, %v336
        %v349 = vpack.c.b16 %v339, %v338
        %v350 = vpack.c.b16 %v341, %v340
        %v351 = vpack.c.b16 %v343, %v342
        %360 = vmatprep.subr.bf16.mxu0 0
        %361 = vmatpush1.bf16.msra.mxu0 %v344
        %362 = vmatprep.subr.bf16.mxu0 0
        %363 = vmatpush1.bf16.msra.mxu0 %v345
        %364 = vmatprep.subr.bf16.mxu0 0
        %365 = vmatpush1.bf16.msra.mxu0 %v346
        %366 = vmatprep.subr.bf16.mxu0 0
        %367 = vmatpush1.bf16.msra.mxu0 %v347
        %368 = vmatprep.subr.bf16.mxu0 0
        %369 = vmatpush1.bf16.msra.mxu0 %v348
        %370 = vmatprep.subr.bf16.mxu0 0
        %371 = vmatpush1.bf16.msra.mxu0 %v349
        %372 = vmatprep.subr.bf16.mxu0 0
        %373 = vmatpush1.bf16.msra.mxu0 %v350
        %374 = vmatprep.subr.bf16.mxu0 0
        %375 = vmatpush1.bf16.msra.mxu0 %v351
        %376 = vmatprep.subr.bf16.mxu0 0
        %377 = vmatpush1.bf16.msra.mxu0 0
        %378 = vmatprep.subr.bf16.mxu0 0
        %379 = vmatpush1.bf16.msra.mxu0 0
        %380 = vmatprep.subr.bf16.mxu0 0
        %381 = vmatpush1.bf16.msra.mxu0 0
        %382 = vmatprep.subr.bf16.mxu0 0
        %383 = vmatpush1.bf16.msra.mxu0 0
        %384 = vmatprep.subr.bf16.mxu0 0
        %385 = vmatpush1.bf16.msra.mxu0 0
        %386 = vmatprep.subr.bf16.mxu0 0
        %387 = vmatpush1.bf16.msra.mxu0 0
        %388 = vmatprep.subr.bf16.mxu0 0
        %389 = vmatpush1.bf16.msra.mxu0 0
        %390 = vmatprep.subr.bf16.mxu0 0
        %391 = vmatpush1.bf16.msra.mxu0 0
        %392 = vmatprep.mubr.bf16.mxu0 0
        %393 = vmatmul.mubr.bf16.gmra.mrb[0].mxu0 %v311
        %v394 = vpop.f32.mrb[0].mxu0
        %v395 = vadd.f32 0.0, %v394
        %v396 = vpop.f32.mrb[0].mxu0
        %v397 = vpop.f32.mrb[0].mxu0
        %v398 = vadd.f32 0.0, %v397
        %v399 = vpop.f32.mrb[0].mxu0
        %400 = vdwg.mxu0
        %v401 = vpack.c.bf16 %v398, %v395
        %v402 = vld [vmem:[%s2] sm:$0xf]
        %v403 = vld [vmem:[%s2 + $0x4] sm:$0xf]
        %v404 = vld [vmem:[%s2 + $0x8] sm:$0xf]
        %v405 = vld [vmem:[%s2 + $0xc] sm:$0xf]
        %406 = vset.pattern.permute.xlu0 1
        %407 = vperm.xlu0 %406, %v279
        %v408 = vpop.permute.xlu0 %407
        %409 = vset.pattern.permute.xlu0 1
        %410 = vperm.xlu0 %409, %v280
        %v411 = vpop.permute.xlu0 %410
        %vm412 = vcmp.eq.s32.totalorder %v408, %v282
        %vm413 = vcmp.eq.s32.totalorder %v411, %v282
        %v414 = vsel %vm412, 1, 0
        %v415 = vsel %vm413, 1, 0
        %v416 = vcvt.s32.f32 %v414
        %v417 = vcvt.s32.f32 %v415
        %v418 = vpack.c.bf16 %v417, %v416
        %419 = vmatprep.subr.bf16.mxu0 0
        %420 = vmatpush1.bf16.msra.mxu0 %v344
        %421 = vmatprep.subr.bf16.mxu0 0
        %422 = vmatpush1.bf16.msra.mxu0 %v345
        %423 = vmatprep.subr.bf16.mxu0 0
        %424 = vmatpush1.bf16.msra.mxu0 %v346
        %425 = vmatprep.subr.bf16.mxu0 0
        %426 = vmatpush1.bf16.msra.mxu0 %v347
        %427 = vmatprep.subr.bf16.mxu0 0
        %428 = vmatpush1.bf16.msra.mxu0 %v348
        %429 = vmatprep.subr.bf16.mxu0 0
        %430 = vmatpush1.bf16.msra.mxu0 %v349
        %431 = vmatprep.subr.bf16.mxu0 0
        %432 = vmatpush1.bf16.msra.mxu0 %v350
        %433 = vmatprep.subr.bf16.mxu0 0
        %434 = vmatpush1.bf16.msra.mxu0 %v351
        %435 = vmatprep.subr.bf16.mxu0 0
        %436 = vmatpush1.bf16.msra.mxu0 0
        %437 = vmatprep.subr.bf16.mxu0 0
        %438 = vmatpush1.bf16.msra.mxu0 0
        %439 = vmatprep.subr.bf16.mxu0 0
        %440 = vmatpush1.bf16.msra.mxu0 0
        %441 = vmatprep.subr.bf16.mxu0 0
        %442 = vmatpush1.bf16.msra.mxu0 0
        %443 = vmatprep.subr.bf16.mxu0 0
        %444 = vmatpush1.bf16.msra.mxu0 0
        %445 = vmatprep.subr.bf16.mxu0 0
        %446 = vmatpush1.bf16.msra.mxu0 0
        %447 = vmatprep.subr.bf16.mxu0 0
        %448 = vmatpush1.bf16.msra.mxu0 0
        %449 = vmatprep.subr.bf16.mxu0 0
        %450 = vmatpush1.bf16.msra.mxu0 0
        %451 = vmatprep.mubr.bf16.mxu0 0
        %452 = vmatmul.mubr.bf16.gmra.mrb[0].mxu0 %v418
        %v453 = vpop.f32.mrb[0].mxu0
        %v454 = vadd.f32 0.0, %v453
        %v455 = vpop.f32.mrb[0].mxu0
        %v456 = vpop.f32.mrb[0].mxu0
        %v457 = vadd.f32 0.0, %v456
        %v458 = vpop.f32.mrb[0].mxu0
        %459 = vdwg.mxu0
        %v460 = vpack.c.bf16 %v457, %v454
        %v461 = vld [vmem:[%s2 + $0x10] sm:$0xf]
        %v462 = vld [vmem:[%s2 + $0x14] sm:$0xf]
        %v463 = vld [vmem:[%s2 + $0x18] sm:$0xf]
        %v464 = vld [vmem:[%s2 + $0x1c] sm:$0xf]
        %v469 = vunpack.c.l.b16 %v461
        %v470 = vunpack.c.l.b16 %v462
        %v471 = vunpack.c.l.b16 %v463
        %v472 = vunpack.c.l.b16 %v464
        %v473 = vpack.c.b16 %v470, %v469
        %v474 = vpack.c.b16 %v472, %v471
        %vm477 = vcmask 261120
        %v479 = vsel %vm477, %v460, 0
        %481 = vmatprep.subr.bf16.mxu0 0
        %482 = vmatpush1.bf16.msra.mxu0 %v473
        %483 = vmatprep.subr.bf16.mxu0 0
        %484 = vmatpush1.bf16.msra.mxu0 %v474
        %485 = vmatprep.subr.bf16.mxu0 0
        %486 = vmatpush1.bf16.msra.mxu0 0
        %487 = vmatprep.subr.bf16.mxu0 0
        %488 = vmatpush1.bf16.msra.mxu0 0
        %489 = vmatprep.subr.bf16.mxu0 0
        %490 = vmatpush1.bf16.msra.mxu0 0
        %491 = vmatprep.subr.bf16.mxu0 0
        %492 = vmatpush1.bf16.msra.mxu0 0
        %493 = vmatprep.subr.bf16.mxu0 0
        %494 = vmatpush1.bf16.msra.mxu0 0
        %495 = vmatprep.subr.bf16.mxu0 0
        %496 = vmatpush1.bf16.msra.mxu0 0
        %497 = vmatprep.subr.bf16.mxu0 0
        %498 = vmatpush1.bf16.msra.mxu0 0
        %499 = vmatprep.subr.bf16.mxu0 0
        %500 = vmatpush1.bf16.msra.mxu0 0
        %501 = vmatprep.subr.bf16.mxu0 0
        %502 = vmatpush1.bf16.msra.mxu0 0
        %503 = vmatprep.subr.bf16.mxu0 0
        %504 = vmatpush1.bf16.msra.mxu0 0
        %505 = vmatprep.subr.bf16.mxu0 0
        %506 = vmatpush1.bf16.msra.mxu0 0
        %507 = vmatprep.subr.bf16.mxu0 0
        %508 = vmatpush1.bf16.msra.mxu0 0
        %509 = vmatprep.subr.bf16.mxu0 0
        %510 = vmatpush1.bf16.msra.mxu0 0
        %511 = vmatprep.subr.bf16.mxu0 0
        %512 = vmatpush1.bf16.msra.mxu0 0
        %513 = vmatprep.mubr.bf16.mxu0 0
        %514 = vmatmul.mubr.bf16.gmra.mrb[0].mxu0 %v479
        %v515 = vpop.f32.mrb[0].mxu0
        %v516 = vadd.f32 0.0, %v515
        %v517 = vpop.f32.mrb[0].mxu0
        %v518 = vpop.f32.mrb[0].mxu0
        %v519 = vadd.f32 0.0, %v518
        %v520 = vpop.f32.mrb[0].mxu0
        %521 = vdwg.mxu0
        %v526 = vunpack.c.l.b16 %v402
        %v527 = vunpack.c.l.b16 %v403
        %v528 = vunpack.c.l.b16 %v404
        %v529 = vunpack.c.l.b16 %v405
        %v530 = vpack.c.b16 %v527, %v526
        %v531 = vpack.c.b16 %v529, %v528
        %v535 = vsel %vm477, %v401, 0
        %537 = vmatprep.subr.bf16.mxu0 0
        %538 = vmatpush1.bf16.msra.mxu0 %v530
        %539 = vmatprep.subr.bf16.mxu0 0
        %540 = vmatpush1.bf16.msra.mxu0 %v531
        %541 = vmatprep.subr.bf16.mxu0 0
        %542 = vmatpush1.bf16.msra.mxu0 0
        %543 = vmatprep.subr.bf16.mxu0 0
        %544 = vmatpush1.bf16.msra.mxu0 0
        %545 = vmatprep.subr.bf16.mxu0 0
        %546 = vmatpush1.bf16.msra.mxu0 0
        %547 = vmatprep.subr.bf16.mxu0 0
        %548 = vmatpush1.bf16.msra.mxu0 0
        %549 = vmatprep.subr.bf16.mxu0 0
        %550 = vmatpush1.bf16.msra.mxu0 0
        %551 = vmatprep.subr.bf16.mxu0 0
        %552 = vmatpush1.bf16.msra.mxu0 0
        %553 = vmatprep.subr.bf16.mxu0 0
        %554 = vmatpush1.bf16.msra.mxu0 0
        %555 = vmatprep.subr.bf16.mxu0 0
        %556 = vmatpush1.bf16.msra.mxu0 0
        %557 = vmatprep.subr.bf16.mxu0 0
        %558 = vmatpush1.bf16.msra.mxu0 0
        %559 = vmatprep.subr.bf16.mxu0 0
        %560 = vmatpush1.bf16.msra.mxu0 0
        %561 = vmatprep.subr.bf16.mxu0 0
        %562 = vmatpush1.bf16.msra.mxu0 0
        %563 = vmatprep.subr.bf16.mxu0 0
        %564 = vmatpush1.bf16.msra.mxu0 0
        %565 = vmatprep.subr.bf16.mxu0 0
        %566 = vmatpush1.bf16.msra.mxu0 0
        %567 = vmatprep.subr.bf16.mxu0 0
        %568 = vmatpush1.bf16.msra.mxu0 0
        %569 = vmatprep.mubr.bf16.mxu0 0
        %570 = vmatmul.mubr.bf16.gmra.mrb[0].mxu0 %v535
        %v571 = vpop.f32.mrb[0].mxu0
        %v572 = vadd.f32 %v516, %v571
        %v573 = vpop.f32.mrb[0].mxu0
        %v574 = vpop.f32.mrb[0].mxu0
        %v575 = vadd.f32 %v519, %v574
        %v576 = vpop.f32.mrb[0].mxu0
        %577 = vdwg.mxu0
        %578 = vset.pattern.permute.xlu0 2
        %579 = vperm.xlu0 %578, %v279
        %v580 = vpop.permute.xlu0 %579
        %581 = vset.pattern.permute.xlu0 2
        %582 = vperm.xlu0 %581, %v280
        %v583 = vpop.permute.xlu0 %582
        %vm584 = vcmp.eq.s32.totalorder %v580, %v282
        %vm585 = vcmp.eq.s32.totalorder %v583, %v282
        %v586 = vsel %vm584, 1, 0
        %v587 = vsel %vm585, 1, 0
        %v588 = vcvt.s32.f32 %v586
        %v589 = vcvt.s32.f32 %v587
        %v590 = vpack.c.bf16 %v589, %v588
        %591 = vmatprep.subr.bf16.mxu0 0
        %592 = vmatpush1.bf16.msra.mxu0 %v344
        %593 = vmatprep.subr.bf16.mxu0 0
        %594 = vmatpush1.bf16.msra.mxu0 %v345
        %595 = vmatprep.subr.bf16.mxu0 0
        %596 = vmatpush1.bf16.msra.mxu0 %v346
        %597 = vmatprep.subr.bf16.mxu0 0
        %598 = vmatpush1.bf16.msra.mxu0 %v347
        %599 = vmatprep.subr.bf16.mxu0 0
        %600 = vmatpush1.bf16.msra.mxu0 %v348
        %601 = vmatprep.subr.bf16.mxu0 0
        %602 = vmatpush1.bf16.msra.mxu0 %v349
        %603 = vmatprep.subr.bf16.mxu0 0
        %604 = vmatpush1.bf16.msra.mxu0 %v350
        %605 = vmatprep.subr.bf16.mxu0 0
        %606 = vmatpush1.bf16.msra.mxu0 %v351
        %607 = vmatprep.subr.bf16.mxu0 0
        %608 = vmatpush1.bf16.msra.mxu0 0
        %609 = vmatprep.subr.bf16.mxu0 0
        %610 = vmatpush1.bf16.msra.mxu0 0
        %611 = vmatprep.subr.bf16.mxu0 0
        %612 = vmatpush1.bf16.msra.mxu0 0
        %613 = vmatprep.subr.bf16.mxu0 0
        %614 = vmatpush1.bf16.msra.mxu0 0
        %615 = vmatprep.subr.bf16.mxu0 0
        %616 = vmatpush1.bf16.msra.mxu0 0
        %617 = vmatprep.subr.bf16.mxu0 0
        %618 = vmatpush1.bf16.msra.mxu0 0
        %619 = vmatprep.subr.bf16.mxu0 0
        %620 = vmatpush1.bf16.msra.mxu0 0
        %621 = vmatprep.subr.bf16.mxu0 0
        %622 = vmatpush1.bf16.msra.mxu0 0
        %623 = vmatprep.mubr.bf16.mxu0 0
        %624 = vmatmul.mubr.bf16.gmra.mrb[0].mxu0 %v590
        %v625 = vpop.f32.mrb[0].mxu0
        %v626 = vadd.f32 0.0, %v625
        %v627 = vpop.f32.mrb[0].mxu0
        %v628 = vpop.f32.mrb[0].mxu0
        %v629 = vadd.f32 0.0, %v628
        %v630 = vpop.f32.mrb[0].mxu0
        %631 = vdwg.mxu0
        %v632 = vpack.c.bf16 %v629, %v626
        %v633 = vld [vmem:[%s2 + $0x20] sm:$0xf]
        %v634 = vld [vmem:[%s2 + $0x24] sm:$0xf]
        %v635 = vld [vmem:[%s2 + $0x28] sm:$0xf]
        %v636 = vld [vmem:[%s2 + $0x2c] sm:$0xf]
        %v641 = vunpack.c.l.b16 %v633
        %v642 = vunpack.c.l.b16 %v634
        %v643 = vunpack.c.l.b16 %v635
        %v644 = vunpack.c.l.b16 %v636
        %v645 = vpack.c.b16 %v642, %v641
        %v646 = vpack.c.b16 %v644, %v643
        %v650 = vsel %vm477, %v632, 0
        %652 = vmatprep.subr.bf16.mxu0 0
        %653 = vmatpush1.bf16.msra.mxu0 %v645
        %654 = vmatprep.subr.bf16.mxu0 0
        %655 = vmatpush1.bf16.msra.mxu0 %v646
        %656 = vmatprep.subr.bf16.mxu0 0
        %657 = vmatpush1.bf16.msra.mxu0 0
        %658 = vmatprep.subr.bf16.mxu0 0
        %659 = vmatpush1.bf16.msra.mxu0 0
        %660 = vmatprep.subr.bf16.mxu0 0
        %661 = vmatpush1.bf16.msra.mxu0 0
        %662 = vmatprep.subr.bf16.mxu0 0
        %663 = vmatpush1.bf16.msra.mxu0 0
        %664 = vmatprep.subr.bf16.mxu0 0
        %665 = vmatpush1.bf16.msra.mxu0 0
        %666 = vmatprep.subr.bf16.mxu0 0
        %667 = vmatpush1.bf16.msra.mxu0 0
        %668 = vmatprep.subr.bf16.mxu0 0
        %669 = vmatpush1.bf16.msra.mxu0 0
        %670 = vmatprep.subr.bf16.mxu0 0
        %671 = vmatpush1.bf16.msra.mxu0 0
        %672 = vmatprep.subr.bf16.mxu0 0
        %673 = vmatpush1.bf16.msra.mxu0 0
        %674 = vmatprep.subr.bf16.mxu0 0
        %675 = vmatpush1.bf16.msra.mxu0 0
        %676 = vmatprep.subr.bf16.mxu0 0
        %677 = vmatpush1.bf16.msra.mxu0 0
        %678 = vmatprep.subr.bf16.mxu0 0
        %679 = vmatpush1.bf16.msra.mxu0 0
        %680 = vmatprep.subr.bf16.mxu0 0
        %681 = vmatpush1.bf16.msra.mxu0 0
        %682 = vmatprep.subr.bf16.mxu0 0
        %683 = vmatpush1.bf16.msra.mxu0 0
        %684 = vmatprep.mubr.bf16.mxu0 0
        %685 = vmatmul.mubr.bf16.gmra.mrb[0].mxu0 %v650
        %v686 = vpop.f32.mrb[0].mxu0
        %v687 = vadd.f32 0.0, %v686
        %v688 = vpop.f32.mrb[0].mxu0
        %v689 = vpop.f32.mrb[0].mxu0
        %v690 = vadd.f32 0.0, %v689
        %v691 = vpop.f32.mrb[0].mxu0
        %692 = vdwg.mxu0
        %v693 = vadd.f32 %v572, %v687
        %v694 = vadd.f32 %v575, %v690
        %695 = vset.pattern.permute.xlu0 3
        %696 = vperm.xlu0 %695, %v279
        %v697 = vpop.permute.xlu0 %696
        %698 = vset.pattern.permute.xlu0 3
        %699 = vperm.xlu0 %698, %v280
        %v700 = vpop.permute.xlu0 %699
        %vm701 = vcmp.eq.s32.totalorder %v697, %v282
        %vm702 = vcmp.eq.s32.totalorder %v700, %v282
        %v703 = vsel %vm701, 1, 0
        %v704 = vsel %vm702, 1, 0
        %v705 = vcvt.s32.f32 %v703
        %v706 = vcvt.s32.f32 %v704
        %v707 = vpack.c.bf16 %v706, %v705
        %708 = vmatprep.subr.bf16.mxu0 0
        %709 = vmatpush1.bf16.msra.mxu0 %v344
        %710 = vmatprep.subr.bf16.mxu0 0
        %711 = vmatpush1.bf16.msra.mxu0 %v345
        %712 = vmatprep.subr.bf16.mxu0 0
        %713 = vmatpush1.bf16.msra.mxu0 %v346
        %714 = vmatprep.subr.bf16.mxu0 0
        %715 = vmatpush1.bf16.msra.mxu0 %v347
        %716 = vmatprep.subr.bf16.mxu0 0
        %717 = vmatpush1.bf16.msra.mxu0 %v348
        %718 = vmatprep.subr.bf16.mxu0 0
        %719 = vmatpush1.bf16.msra.mxu0 %v349
        %720 = vmatprep.subr.bf16.mxu0 0
        %721 = vmatpush1.bf16.msra.mxu0 %v350
        %722 = vmatprep.subr.bf16.mxu0 0
        %723 = vmatpush1.bf16.msra.mxu0 %v351
        %724 = vmatprep.subr.bf16.mxu0 0
        %725 = vmatpush1.bf16.msra.mxu0 0
        %726 = vmatprep.subr.bf16.mxu0 0
        %727 = vmatpush1.bf16.msra.mxu0 0
        %728 = vmatprep.subr.bf16.mxu0 0
        %729 = vmatpush1.bf16.msra.mxu0 0
        %730 = vmatprep.subr.bf16.mxu0 0
        %731 = vmatpush1.bf16.msra.mxu0 0
        %732 = vmatprep.subr.bf16.mxu0 0
        %733 = vmatpush1.bf16.msra.mxu0 0
        %734 = vmatprep.subr.bf16.mxu0 0
        %735 = vmatpush1.bf16.msra.mxu0 0
        %736 = vmatprep.subr.bf16.mxu0 0
        %737 = vmatpush1.bf16.msra.mxu0 0
        %738 = vmatprep.subr.bf16.mxu0 0
        %739 = vmatpush1.bf16.msra.mxu0 0
        %740 = vmatprep.mubr.bf16.mxu0 0
        %741 = vmatmul.mubr.bf16.gmra.mrb[0].mxu0 %v707
        %v742 = vpop.f32.mrb[0].mxu0
        %v743 = vadd.f32 0.0, %v742
        %v744 = vpop.f32.mrb[0].mxu0
        %v745 = vpop.f32.mrb[0].mxu0
        %v746 = vadd.f32 0.0, %v745
        %v747 = vpop.f32.mrb[0].mxu0
        %748 = vdwg.mxu0
        %v749 = vpack.c.bf16 %v746, %v743
        %v750 = vld [vmem:[%s2 + $0x30] sm:$0xf]
        %v751 = vld [vmem:[%s2 + $0x34] sm:$0xf]
        %v752 = vld [vmem:[%s2 + $0x38] sm:$0xf]
        %v753 = vld [vmem:[%s2 + $0x3c] sm:$0xf]
        %v758 = vunpack.c.l.b16 %v750
        %v759 = vunpack.c.l.b16 %v751
        %v760 = vunpack.c.l.b16 %v752
        %v761 = vunpack.c.l.b16 %v753
        %v762 = vpack.c.b16 %v759, %v758
        %v763 = vpack.c.b16 %v761, %v760
        %v767 = vsel %vm477, %v749, 0
        %769 = vmatprep.subr.bf16.mxu0 0
        %770 = vmatpush1.bf16.msra.mxu0 %v762
        %771 = vmatprep.subr.bf16.mxu0 0
        %772 = vmatpush1.bf16.msra.mxu0 %v763
        %773 = vmatprep.subr.bf16.mxu0 0
        %774 = vmatpush1.bf16.msra.mxu0 0
        %775 = vmatprep.subr.bf16.mxu0 0
        %776 = vmatpush1.bf16.msra.mxu0 0
        %777 = vmatprep.subr.bf16.mxu0 0
        %778 = vmatpush1.bf16.msra.mxu0 0
        %779 = vmatprep.subr.bf16.mxu0 0
        %780 = vmatpush1.bf16.msra.mxu0 0
        %781 = vmatprep.subr.bf16.mxu0 0
        %782 = vmatpush1.bf16.msra.mxu0 0
        %783 = vmatprep.subr.bf16.mxu0 0
        %784 = vmatpush1.bf16.msra.mxu0 0
        %785 = vmatprep.subr.bf16.mxu0 0
        %786 = vmatpush1.bf16.msra.mxu0 0
        %787 = vmatprep.subr.bf16.mxu0 0
        %788 = vmatpush1.bf16.msra.mxu0 0
        %789 = vmatprep.subr.bf16.mxu0 0
        %790 = vmatpush1.bf16.msra.mxu0 0
        %791 = vmatprep.subr.bf16.mxu0 0
        %792 = vmatpush1.bf16.msra.mxu0 0
        %793 = vmatprep.subr.bf16.mxu0 0
        %794 = vmatpush1.bf16.msra.mxu0 0
        %795 = vmatprep.subr.bf16.mxu0 0
        %796 = vmatpush1.bf16.msra.mxu0 0
        %797 = vmatprep.subr.bf16.mxu0 0
        %798 = vmatpush1.bf16.msra.mxu0 0
        %799 = vmatprep.subr.bf16.mxu0 0
        %800 = vmatpush1.bf16.msra.mxu0 0
        %801 = vmatprep.mubr.bf16.mxu0 0
        %802 = vmatmul.mubr.bf16.gmra.mrb[0].mxu0 %v767
        %v803 = vpop.f32.mrb[0].mxu0
        %v804 = vadd.f32 0.0, %v803
        %v805 = vpop.f32.mrb[0].mxu0
        %v806 = vpop.f32.mrb[0].mxu0
        %v807 = vadd.f32 0.0, %v806
        %v808 = vpop.f32.mrb[0].mxu0
        %809 = vdwg.mxu0
        %v810 = vadd.f32 %v693, %v804
        %v811 = vadd.f32 %v694, %v807
        %812 = vset.pattern.permute.xlu0 4
        %813 = vperm.xlu0 %812, %v279
        %v814 = vpop.permute.xlu0 %813
        %815 = vset.pattern.permute.xlu0 4
        %816 = vperm.xlu0 %815, %v280
        %v817 = vpop.permute.xlu0 %816
        %vm818 = vcmp.eq.s32.totalorder %v814, %v282
        %vm819 = vcmp.eq.s32.totalorder %v817, %v282
        %v820 = vsel %vm818, 1, 0
        %v821 = vsel %vm819, 1, 0
        %v822 = vcvt.s32.f32 %v820
        %v823 = vcvt.s32.f32 %v821
        %v824 = vpack.c.bf16 %v823, %v822
        %825 = vmatprep.subr.bf16.mxu0 0
        %826 = vmatpush1.bf16.msra.mxu0 %v344
        %827 = vmatprep.subr.bf16.mxu0 0
        %828 = vmatpush1.bf16.msra.mxu0 %v345
        %829 = vmatprep.subr.bf16.mxu0 0
        %830 = vmatpush1.bf16.msra.mxu0 %v346
        %831 = vmatprep.subr.bf16.mxu0 0
        %832 = vmatpush1.bf16.msra.mxu0 %v347
        %833 = vmatprep.subr.bf16.mxu0 0
        %834 = vmatpush1.bf16.msra.mxu0 %v348
        %835 = vmatprep.subr.bf16.mxu0 0
        %836 = vmatpush1.bf16.msra.mxu0 %v349
        %837 = vmatprep.subr.bf16.mxu0 0
        %838 = vmatpush1.bf16.msra.mxu0 %v350
        %839 = vmatprep.subr.bf16.mxu0 0
        %840 = vmatpush1.bf16.msra.mxu0 %v351
        %841 = vmatprep.subr.bf16.mxu0 0
        %842 = vmatpush1.bf16.msra.mxu0 0
        %843 = vmatprep.subr.bf16.mxu0 0
        %844 = vmatpush1.bf16.msra.mxu0 0
        %845 = vmatprep.subr.bf16.mxu0 0
        %846 = vmatpush1.bf16.msra.mxu0 0
        %847 = vmatprep.subr.bf16.mxu0 0
        %848 = vmatpush1.bf16.msra.mxu0 0
        %849 = vmatprep.subr.bf16.mxu0 0
        %850 = vmatpush1.bf16.msra.mxu0 0
        %851 = vmatprep.subr.bf16.mxu0 0
        %852 = vmatpush1.bf16.msra.mxu0 0
        %853 = vmatprep.subr.bf16.mxu0 0
        %854 = vmatpush1.bf16.msra.mxu0 0
        %855 = vmatprep.subr.bf16.mxu0 0
        %856 = vmatpush1.bf16.msra.mxu0 0
        %857 = vmatprep.mubr.bf16.mxu0 0
        %858 = vmatmul.mubr.bf16.gmra.mrb[0].mxu0 %v824
        %v859 = vpop.f32.mrb[0].mxu0
        %v860 = vadd.f32 0.0, %v859
        %v861 = vpop.f32.mrb[0].mxu0
        %v862 = vpop.f32.mrb[0].mxu0
        %v863 = vadd.f32 0.0, %v862
        %v864 = vpop.f32.mrb[0].mxu0
        %865 = vdwg.mxu0
        %v866 = vpack.c.bf16 %v863, %v860
        %v867 = vld [vmem:[%s2 + $0x40] sm:$0xf]
        %v868 = vld [vmem:[%s2 + $0x44] sm:$0xf]
        %v869 = vld [vmem:[%s2 + $0x48] sm:$0xf]
        %v870 = vld [vmem:[%s2 + $0x4c] sm:$0xf]
        %v875 = vunpack.c.l.b16 %v867
        %v876 = vunpack.c.l.b16 %v868
        %v877 = vunpack.c.l.b16 %v869
        %v878 = vunpack.c.l.b16 %v870
        %v879 = vpack.c.b16 %v876, %v875
        %v880 = vpack.c.b16 %v878, %v877
        %v884 = vsel %vm477, %v866, 0
        %886 = vmatprep.subr.bf16.mxu0 0
        %887 = vmatpush1.bf16.msra.mxu0 %v879
        %888 = vmatprep.subr.bf16.mxu0 0
        %889 = vmatpush1.bf16.msra.mxu0 %v880
        %890 = vmatprep.subr.bf16.mxu0 0
        %891 = vmatpush1.bf16.msra.mxu0 0
        %892 = vmatprep.subr.bf16.mxu0 0
        %893 = vmatpush1.bf16.msra.mxu0 0
        %894 = vmatprep.subr.bf16.mxu0 0
        %895 = vmatpush1.bf16.msra.mxu0 0
        %896 = vmatprep.subr.bf16.mxu0 0
        %897 = vmatpush1.bf16.msra.mxu0 0
        %898 = vmatprep.subr.bf16.mxu0 0
        %899 = vmatpush1.bf16.msra.mxu0 0
        %900 = vmatprep.subr.bf16.mxu0 0
        %901 = vmatpush1.bf16.msra.mxu0 0
        %902 = vmatprep.subr.bf16.mxu0 0
        %903 = vmatpush1.bf16.msra.mxu0 0
        %904 = vmatprep.subr.bf16.mxu0 0
        %905 = vmatpush1.bf16.msra.mxu0 0
        %906 = vmatprep.subr.bf16.mxu0 0
        %907 = vmatpush1.bf16.msra.mxu0 0
        %908 = vmatprep.subr.bf16.mxu0 0
        %909 = vmatpush1.bf16.msra.mxu0 0
        %910 = vmatprep.subr.bf16.mxu0 0
        %911 = vmatpush1.bf16.msra.mxu0 0
        %912 = vmatprep.subr.bf16.mxu0 0
        %913 = vmatpush1.bf16.msra.mxu0 0
        %914 = vmatprep.subr.bf16.mxu0 0
        %915 = vmatpush1.bf16.msra.mxu0 0
        %916 = vmatprep.subr.bf16.mxu0 0
        %917 = vmatpush1.bf16.msra.mxu0 0
        %918 = vmatprep.mubr.bf16.mxu0 0
        %919 = vmatmul.mubr.bf16.gmra.mrb[0].mxu0 %v884
        %v920 = vpop.f32.mrb[0].mxu0
        %v921 = vadd.f32 0.0, %v920
        %v922 = vpop.f32.mrb[0].mxu0
        %v923 = vpop.f32.mrb[0].mxu0
        %v924 = vadd.f32 0.0, %v923
        %v925 = vpop.f32.mrb[0].mxu0
        %926 = vdwg.mxu0
        %v927 = vadd.f32 %v810, %v921
        %v928 = vadd.f32 %v811, %v924
        %v929 = vld [vmem:[%s3] sm:$0x1]
        %v931 = vlaneseq
        %v932 = vshrl.u32 %v931, 7
        %v933 = vsub.s32 0, %v932
        %v934 = vrot.slane %v929, %v933
        %v936 = vadd.f32 %v927, %v934
        %v937 = vadd.f32 %v928, %v934
        %v938 = vmax.f32 %v936, 0.0
        %v939 = vmax.f32 %v937, 0.0
        %v940 = vld [vmem:[%s4] sm:$0xff]
        %v941 = vld [vmem:[%s4 + $0x8] sm:$0xff]
        %v942 = vmul.f32 %v938, %v940
        %v943 = vmul.f32 %v939, %v941
        %v944 = vmax.f32 %v942, %v943
        %v945 = vrot.slane %v944, 4
        %v946 = vmax.f32 %v944, %v945
        %v947 = vrot.slane %v946, 2
        %v948 = vmax.f32 %v946, %v947
        %v949 = vrot.slane %v948, 1
        %v950 = vmax.f32 %v948, %v949
        %v951 = vld [vmem:[%s5] sm:$0xff]
        %v952 = vld [vmem:[%s5 + $0x8] sm:$0xff]
        %v953 = vld [vmem:[%s5 + $0x10] sm:$0xff]
        %v954 = vld [vmem:[%s5 + $0x18] sm:$0xff]
        %v955 = vld [vmem:[%s5 + $0x20] sm:$0xff]
        %v956 = vld [vmem:[%s5 + $0x28] sm:$0xff]
        %v957 = vld [vmem:[%s5 + $0x30] sm:$0xff]
        %v958 = vld [vmem:[%s5 + $0x38] sm:$0xff]
        %v959 = vld [vmem:[%s5 + $0x40] sm:$0xff]
        %v960 = vld [vmem:[%s5 + $0x48] sm:$0xff]
        %v961 = vld [vmem:[%s5 + $0x50] sm:$0xff]
        %v962 = vld [vmem:[%s5 + $0x58] sm:$0xff]
        %v963 = vld [vmem:[%s5 + $0x60] sm:$0xff]
        %v964 = vld [vmem:[%s5 + $0x68] sm:$0xff]
        %v965 = vld [vmem:[%s5 + $0x70] sm:$0xff]
        %v966 = vld [vmem:[%s5 + $0x78] sm:$0xff]
        %v967 = vld [vmem:[%s6] sm:$0x1]
        %968 = vmatprep.subr.mxu0 0.0
        %969 = vmatpush1.msra.mxu0 %v951
        %970 = vmatprep.subr.mxu0 0.0
        %971 = vmatpush1.msra.mxu0 %v952
        %972 = vmatprep.subr.mxu0 0.0
        %973 = vmatpush1.msra.mxu0 %v953
        %974 = vmatprep.subr.mxu0 0.0
        %975 = vmatpush1.msra.mxu0 %v954
        %976 = vmatprep.subr.mxu0 0.0
        %977 = vmatpush1.msra.mxu0 %v955
        %978 = vmatprep.subr.mxu0 0.0
        %979 = vmatpush1.msra.mxu0 %v956
        %980 = vmatprep.subr.mxu0 0.0
        %981 = vmatpush1.msra.mxu0 %v957
        %982 = vmatprep.subr.mxu0 0.0
        %983 = vmatpush1.msra.mxu0 %v958
        %984 = vmatprep.subr.mxu0 0.0
        %985 = vmatpush1.msra.mxu0 %v959
        %986 = vmatprep.subr.mxu0 0.0
        %987 = vmatpush1.msra.mxu0 %v960
        %988 = vmatprep.subr.mxu0 0.0
        %989 = vmatpush1.msra.mxu0 %v961
        %990 = vmatprep.subr.mxu0 0.0
        %991 = vmatpush1.msra.mxu0 %v962
        %992 = vmatprep.subr.mxu0 0.0
        %993 = vmatpush1.msra.mxu0 %v963
        %994 = vmatprep.subr.mxu0 0.0
        %995 = vmatpush1.msra.mxu0 %v964
        %996 = vmatprep.subr.mxu0 0.0
        %997 = vmatpush1.msra.mxu0 %v965
        %998 = vmatprep.subr.mxu0 0.0
        %999 = vmatpush1.msra.mxu0 %v966
        %1000 = vmatprep.subr.mxu0 0.0
        %1001 = vmatpush1.msra.mxu0 0.0
        %1002 = vmatprep.subr.mxu0 0.0
        %1003 = vmatpush1.msra.mxu0 0.0
        %1004 = vmatprep.subr.mxu0 0.0
        %1005 = vmatpush1.msra.mxu0 0.0
        %1006 = vmatprep.subr.mxu0 0.0
        %1007 = vmatpush1.msra.mxu0 0.0
        %1008 = vmatprep.subr.mxu0 0.0
        %1009 = vmatpush1.msra.mxu0 0.0
        %1010 = vmatprep.subr.mxu0 0.0
        %1011 = vmatpush1.msra.mxu0 0.0
        %1012 = vmatprep.subr.mxu0 0.0
        %1013 = vmatpush1.msra.mxu0 0.0
        %1014 = vmatprep.subr.mxu0 0.0
        %1015 = vmatpush1.msra.mxu0 0.0
        %1016 = vmatprep.subr.mxu0 0.0
        %1017 = vmatpush1.msra.mxu0 0.0
        %1018 = vmatprep.subr.mxu0 0.0
        %1019 = vmatpush1.msra.mxu0 0.0
        %1020 = vmatprep.subr.mxu0 0.0
        %1021 = vmatpush1.msra.mxu0 0.0
        %1022 = vmatprep.subr.mxu0 0.0
        %1023 = vmatpush1.msra.mxu0 0.0
        %1024 = vmatprep.subr.mxu0 0.0
        %1025 = vmatpush1.msra.mxu0 0.0
        %1026 = vmatprep.subr.mxu0 0.0
        %1027 = vmatpush1.msra.mxu0 0.0
        %1028 = vmatprep.subr.mxu0 0.0
        %1029 = vmatpush1.msra.mxu0 0.0
        %1030 = vmatprep.subr.mxu0 0.0
        %1031 = vmatpush1.msra.mxu0 0.0
        %1032 = vmatprep.mubr.f32.mxu0 0.0
        %1033 = vmatmul.mubr.f32.gmra.mrb[0].mxu0 %v950
        %v1034 = vpop.f32.mrb[0].mxu0
        %v1035 = vadd.f32 %v967, %v1034
        %v1036 = vpop.f32.mrb[0].mxu0
        %1037 = vdwg.mxu0
        %vm1038 = vcmask 24576
        %v1039 = vsel %vm1038, %v1035, -inf
        %1040 = vmax.xlane.f32.xlu0 %v1039
        %v1041 = vpop.xlane.xlu0 %1040
        %v1042 = vsub.f32 %v1035, %v1041
        %v1043 = vmul.f32 %v1042, 1.442695
        %v1044 = vpow.pop %v1043
        %v1045 = vsel %vm1038, %v1044, 0.0
        %1046 = vadd.xlane.f32.xlu0 %v1045
        %v1047 = vpop.xlane.xlu0 %1046
        %v1048 = vlog2.pop %v1047
        %v1049 = vmul.f32 %v1048, 0.6931472
        %v1050 = vsub.f32 %v1042, %v1049
        %1051 = vst.msk [vmem:[%s271] sm:$0x1] %vm1038, %v1050
        %s1052 = sand.u32 %s181, 1
        %s1053 = scalar_lea.sflag [#allocation3], %s1052
        %s1054 = sand.u32 %s181, 1
        %s1055 = scalar_lea.vmem [#allocation2], %s1054
        // Predicated region
        $region49: #{tpu_custom_call.1} parent=47 // pred_check
          %p1056 = pneg %p191
        $region50: #{tpu_custom_call.1} parent=47 // pred_check_branch
          %1058 = sbr.rel (%p1056) target = $region52
        $region51: #{tpu_custom_call.1} parent=47 // pred_region
          %s1060 = ssub.s32 16, 16
          %1061 = vsyncadd %s1053, %s1060
          %s1062 = smul.addr %s21, 16
          %s1063 = scalar_lea.hbm %s7, %s1062
          %s1065 = sshll.u32 %s1055, 4
          %s1066 = int_to_ptr.vmem [resolvable:$true] %s1065
          %1068 = dma.vmem_to_hbm [thread:$0]  %s1066, 16, %s1063, %s1053
        $region52: #{tpu_custom_call.1} parent=47 // pred_fallthru
          _
      $region48: #{tpu_custom_call.1} parent=5 // pred_fallthru
        _
      %p1069 = scmp.le.s32.totalorder 2, %s16
      // Predicated region
      $region53: #{tpu_custom_call.1} parent=5 // pred_check
        %p1070 = pneg %p1069
      $region54: #{tpu_custom_call.1} parent=5 // pred_check_branch
        %1072 = sbr.rel (%p1070) target = $region56
      $region55: #{tpu_custom_call.1} parent=5 // pred_region
        %s1073 = ssub.s32 %s16, 2
        // Predicated region
        $region57: #{tpu_custom_call.1} parent=55 // pred_check
          %p1074 = pneg %p197
        $region58: #{tpu_custom_call.1} parent=55 // pred_check_branch
          %1076 = sbr.rel (%p1074) target = $region60
        $region59: #{tpu_custom_call.1} parent=55 // pred_region
          %s1077 = sand.u32 %s182, 1
          %s1078 = scalar_lea.sflag [#allocation3], %s1077
          %s1079 = sand.u32 %s182, 1
          %s1080 = scalar_lea.vmem [#allocation2], %s1079
          %1081 = dma.done %s1078, 16
        $region60: #{tpu_custom_call.1} parent=55 // pred_fallthru
          _
      $region56: #{tpu_custom_call.1} parent=5 // pred_fallthru
        _
    $region6: #{tpu_custom_call.1} parent=1 // loop_footer
      %s20 = sadd.s32 1, %s16
    $region7: #{tpu_custom_call.1} parent=1 // loop_footer_branch
      %15 = sbr.rel target = $region3
    $region8: #{tpu_custom_call.1} parent=1 // loop_exit
      _
    %1082 = vsyncpa [#allocation3], 1
    %s1083 = scalar_lea.sflag [#allocation3], 1
    %1084 = vsyncpa %s1083, 1

</llo_original>
